<compile_context>
chip_gen: v5e
topology: v5e:2x2
jax: 0.10.0
libtpu: 0.0.40
codegen_flags: <defaults>
</compile_context>

<pallas_src>
import functools

import jax
import jax.numpy as jnp
from jax import lax
from jax.experimental import pallas as pl
from jax.experimental.pallas import tpu as pltpu


def _round_up(x: int, m: int) -> int:
    return ((x + m - 1) // m) * m


def _vmem_capacity_bytes() -> int:
    try:
        cap = getattr(pltpu.get_tpu_info(), "vmem_capacity_bytes", None)
        if cap:
            return int(cap)
    except Exception:
        pass
    return 64 * 1024 * 1024  # conservative default: v7x per-TensorCore VMEM


def _vmem_estimate(tile_b: int, tile_t: int, d_pad: int, dot_bytes: int) -> int:
    return (2 * tile_b * d_pad * dot_bytes      # anchor tile, double-buffered
            + 2 * tile_t * d_pad * dot_bytes    # target tile, double-buffered
            + 6 * tile_b * tile_t * 4           # f32 sim / exp temporaries (headroom)
            + 4 * tile_b * 4                    # per-row output + LSE scratch
            + (2 << 20))                        # misc slack


def _l2_normalize(x: jax.Array) -> jax.Array:
    # torch F.normalize(p=2, dim=1, eps=1e-12): x / max(||x||, eps)  (1e-24 = eps^2)
    ss = jnp.sum(x * x, axis=1, keepdims=True)
    return x * lax.rsqrt(jnp.maximum(ss, jnp.float32(1e-24)))


def _pad2d(x: jax.Array, rows: int, cols: int) -> jax.Array:
    r, c = x.shape
    if (r, c) == (rows, cols):
        return x
    return jnp.pad(x, ((0, rows - r), (0, cols - c)))


def _mnrl_kernel(a_ref, t_ref, out_ref, m_sc, l_sc, *,
                 tile_t: int, t_valid: int, need_mask: bool):
    j = pl.program_id(1)

    @pl.when(j == 0)
    def _init():
        m_sc[...] = jnp.full_like(m_sc, -jnp.inf)
        l_sc[...] = jnp.zeros_like(l_sc)

    # (tile_b, tile_t) similarity tile on the MXU.  Anchors already carry the row
    # normalization and the `scale` factor; targets are already normalized.
    sim = lax.dot_general(a_ref[...], t_ref[...],
                          dimension_numbers=(((1,), (1,)), ((), ())),
                          preferred_element_type=jnp.float32)

    if need_mask:
        # Mask padded target columns so they do not contribute to the logsumexp.
        col = j * tile_t + lax.broadcasted_iota(jnp.int32, (1, tile_t), 1)
        sim = jnp.where(col < t_valid, sim, jnp.float32(-1e30))

    # Online (flash-style) logsumexp across the target axis.
    m_prev = m_sc[...]
    m_new = jnp.maximum(m_prev, jnp.max(sim, axis=1, keepdims=True))
    alpha = jnp.exp(m_prev - m_new)
    l_sc[...] = alpha * l_sc[...] + jnp.sum(jnp.exp(sim - m_new), axis=1, keepdims=True)
    m_sc[...] = m_new

    @pl.when(j == pl.num_programs(1) - 1)
    def _finalize():
        out_ref[...] = m_sc[...] + jnp.log(l_sc[...])


def multiple_negatives_ranking_loss(anchors: jax.Array,
                                    positives: jax.Array,
                                    negatives: jax.Array,
                                    scale: float = 20.0,
                                    tile_b: int = 256,
                                    tile_t: int = 512,
                                    dot_dtype=None) -> jax.Array:
    b, d = anchors.shape
    n = negatives.shape[0]
    assert positives.shape == (b, d)
    assert n == 0 or negatives.shape[1] == d

    # ---- wrapper-side precompute (one fused rowwise pass per input) -------------
    a_hat = _l2_normalize(anchors.astype(jnp.float32))
    p_hat = _l2_normalize(positives.astype(jnp.float32))
    g_hat = _l2_normalize(negatives.astype(jnp.float32))

    # Diagonal (label) term sim[i, i] = scale * <a_hat_i, p_hat_i>: a cheap BxD
    # rowwise dot done here once, subtracted from the per-row LSE after the kernel.
    diag = jnp.float32(scale) * jnp.sum(a_hat * p_hat, axis=1)

    # bf16 MXU operands: automatic for bf16 inputs, opt-in (dot_dtype=jnp.bfloat16)
    # for f32 inputs -- all generations run bf16 matmul at native MXU rate.
    if dot_dtype is None:
        dot_dtype = jnp.bfloat16 if anchors.dtype == jnp.bfloat16 else jnp.float32
    dot_bytes = jnp.dtype(dot_dtype).itemsize

    a_n = (a_hat * jnp.float32(scale)).astype(dot_dtype)   # scale folded into the small operand
    t_n = jnp.concatenate([p_hat, g_hat], axis=0).astype(dot_dtype)
    t_total = b + n

    # ---- tiling ------------------------------------------------------------------
    d_pad = _round_up(d, 128)                               # MXU contraction alignment
    tile_b = max(8, min(int(tile_b), _round_up(b, 8)))
    # v7x has two TensorCores: keep >=2 tiles on the parallel anchor axis when B is
    # large enough that each half still feeds the MXU well.
    if b >= 256 and _round_up(b, tile_b) // tile_b < 2:
        tile_b = _round_up((b + 1) // 2, 8)
    tile_t = max(128, min(int(tile_t), _round_up(t_total, 128)))

    vmem_cap = _vmem_capacity_bytes()
    cap = (min(vmem_cap, 128 * 1024 * 1024) * 3) // 4       # headroom for compiler scratch

    # Target residency: one target block covering the whole padded target set when it
    # fits; its block index is then constant, so the pipeline fetches targets from HBM
    # once and re-uses them for every anchor-row tile (v5e/v6e memory-bound win).
    t_full = _round_up(t_total, 128)
    if _vmem_estimate(tile_b, t_full, d_pad, dot_bytes) <= cap:
        tile_t = t_full
    # Otherwise shrink until the pipelined working set fits (matters on v7x: 64 MiB).
    while _vmem_estimate(tile_b, tile_t, d_pad, dot_bytes) > cap and (tile_t > 128 or tile_b > 8):
        if tile_t > 128:
            tile_t = max(128, _round_up(tile_t // 2, 128))
        else:
            tile_b = max(8, _round_up(tile_b // 2, 8))

    b_pad = _round_up(b, tile_b)
    t_pad = _round_up(t_total, tile_t)
    need_mask = (t_pad != t_total)

    a_n = _pad2d(a_n, b_pad, d_pad)
    t_n = _pad2d(t_n, t_pad, d_pad)

    vmem_limit = int(min(max(_vmem_estimate(tile_b, tile_t, d_pad, dot_bytes),
                             32 * 1024 * 1024),
                         (vmem_cap * 7) // 8))

    grid = (b_pad // tile_b, t_pad // tile_t)
    kernel = functools.partial(_mnrl_kernel, tile_t=tile_t, t_valid=t_total,
                               need_mask=need_mask)

    # TODO(synk): for target sets too large for one resident block, a manual pl.ANY +
    # make_async_copy residency scheme (or pipeline_mode=pl.Buffered(3) on the target
    # spec) would further hide target re-streaming on v5e/v6e.
    per_row_lse = pl.pallas_call(
        kernel,
        out_shape=jax.ShapeDtypeStruct((b_pad, 1), jnp.float32),
        grid=grid,
        in_specs=[
            pl.BlockSpec((tile_b, d_pad), lambda i, j: (i, 0)),   # scaled, normalized anchors
            pl.BlockSpec((tile_t, d_pad), lambda i, j: (j, 0)),   # normalized targets
        ],
        out_specs=pl.BlockSpec((tile_b, 1), lambda i, j: (i, 0)),
        scratch_shapes=[
            pltpu.VMEM((tile_b, 1), jnp.float32),   # running max
            pltpu.VMEM((tile_b, 1), jnp.float32),   # running sum
        ],
        compiler_params=pltpu.CompilerParams(
            dimension_semantics=("parallel", "arbitrary"),
            vmem_limit_bytes=vmem_limit,
        ),
    )(a_n, t_n)

    # Mean over the B real anchor rows; padded rows are dropped here.
    return jnp.mean(per_row_lse[:b, 0] - diag)


def _reference(anchors, positives, negatives, scale=20.0):
    """Pure-JAX reference for sanity checking."""
    targets = jnp.concatenate([positives, negatives], axis=0)
    eps = 1e-12
    a = anchors / jnp.maximum(jnp.linalg.norm(anchors, axis=1, keepdims=True), eps)
    t = targets / jnp.maximum(jnp.linalg.norm(targets, axis=1, keepdims=True), eps)
    sim = (a @ t.T) * scale
    labels = jnp.arange(sim.shape[0])
    logp = jax.nn.log_softmax(sim, axis=1)
    return -jnp.mean(logp[jnp.arange(sim.shape[0]), labels])


if __name__ == "__main__":
    key = jax.random.PRNGKey(0)
    k1, k2, k3 = jax.random.split(key, 3)

    # Small deterministic example consistent with the module's forward signature.
    B, N, D = 8, 12, 32
    anchors = jax.random.normal(k1, (B, D), dtype=jnp.float32)
    positives = jax.random.normal(k2, (B, D), dtype=jnp.float32)
    negatives = jax.random.normal(k3, (N, D), dtype=jnp.float32)

    loss = jax.block_until_ready(
        multiple_negatives_ranking_loss(anchors, positives, negatives, scale=20.0))
    ref = _reference(anchors, positives, negatives, scale=20.0)
    assert jnp.allclose(loss, ref, rtol=1e-4, atol=1e-4), (loss, ref)

    # Ragged shapes exercising multi-row tiles, anchor-row padding and D padding.
    B2, N2, D2 = 24, 40, 48
    a2 = jax.random.normal(k1, (B2, D2), dtype=jnp.float32)
    p2 = jax.random.normal(k2, (B2, D2), dtype=jnp.float32)
    n2 = jax.random.normal(k3, (N2, D2), dtype=jnp.float32)
    loss2 = jax.block_until_ready(
        multiple_negatives_ranking_loss(a2, p2, n2, scale=20.0, tile_b=16))
    ref2 = _reference(a2, p2, n2, scale=20.0)
    assert jnp.allclose(loss2, ref2, rtol=1e-4, atol=1e-4), (loss2, ref2)

    # Empty negatives (targets are just the positives), as allowed by torch.cat.
    empty = jnp.zeros((0, D), dtype=jnp.float32)
    loss3 = jax.block_until_ready(
        multiple_negatives_ranking_loss(anchors, positives, empty, scale=20.0))
    ref3 = _reference(anchors, positives, empty, scale=20.0)
    assert jnp.allclose(loss3, ref3, rtol=1e-4, atol=1e-4), (loss3, ref3)

    # Opt-in bf16 MXU operands for f32 inputs (looser tolerance by construction).
    loss_bf16 = jax.block_until_ready(
        multiple_negatives_ranking_loss(anchors, positives, negatives, scale=20.0,
                                        dot_dtype=jnp.bfloat16))
    assert jnp.allclose(loss_bf16, ref, rtol=1e-1, atol=1e-1), (loss_bf16, ref)

    print("KERNEL_OK")
</pallas_src>

<mosaic_0001>
module attributes {stable_mosaic.version = 11 : i64} {
  func.func @_mnrl_kernel(%arg0: i32, %arg1: i32, %arg2: memref<8x128xf32, #tpu.memory_space<vmem>>, %arg3: memref<128x128xf32, #tpu.memory_space<vmem>>, %arg4: memref<8x1xf32, #tpu.memory_space<vmem>>, %arg5: memref<8x1xf32, #tpu.memory_space<vmem>>, %arg6: memref<8x1xf32, #tpu.memory_space<vmem>>) attributes {dimension_semantics = [#tpu.dimension_semantics<parallel>, #tpu.dimension_semantics<arbitrary>], iteration_bounds = array<i64: 1, 1>, scalar_prefetch = 0 : i64, scratch_operands = 2 : i64, tpu.core_type = #tpu.core_type<tc>, window_params = [{transform_indices = @transform_0, window_bounds = array<i64: 8, 128>}, {transform_indices = @transform_1, window_bounds = array<i64: 128, 128>}, {transform_indices = @transform_2, window_bounds = array<i64: 8, 1>}]} {
    %c0_i32 = arith.constant 0 : i32
    %0 = arith.cmpi eq, %arg1, %c0_i32 : i32
    %1 = arith.extui %0 : i1 to i32
    %c0_i32_0 = arith.constant 0 : i32
    %2 = arith.cmpi ne, %1, %c0_i32_0 : i32
    scf.if %2 {
      %cst_17 = arith.constant 0xFF800000 : f32
      %35 = vector.broadcast %cst_17 : f32 to vector<8x1xf32>
      %c0_18 = arith.constant 0 : index
      %c0_19 = arith.constant 0 : index
      %36 = vector.load %arg5[%c0_18, %c0_19] : memref<8x1xf32, #tpu.memory_space<vmem>>, vector<8x1xf32>
      tpu.vector_store %arg5[%c0_18, %c0_19], %35 {strides = array<i32>} : memref<8x1xf32, #tpu.memory_space<vmem>>, vector<8x1xf32>,
      %cst_20 = arith.constant 0.000000e+00 : f32
      %37 = vector.broadcast %cst_20 : f32 to vector<8x1xf32>
      %c0_21 = arith.constant 0 : index
      %c0_22 = arith.constant 0 : index
      %38 = vector.load %arg6[%c0_21, %c0_22] : memref<8x1xf32, #tpu.memory_space<vmem>>, vector<8x1xf32>
      tpu.vector_store %arg6[%c0_21, %c0_22], %37 {strides = array<i32>} : memref<8x1xf32, #tpu.memory_space<vmem>>, vector<8x1xf32>,
    } else {
    }
    %c0 = arith.constant 0 : index
    %c0_1 = arith.constant 0 : index
    %3 = vector.load %arg2[%c0, %c0_1] : memref<8x128xf32, #tpu.memory_space<vmem>>, vector<8x128xf32>
    %c0_2 = arith.constant 0 : index
    %c0_3 = arith.constant 0 : index
    %4 = vector.load %arg3[%c0_2, %c0_3] : memref<128x128xf32, #tpu.memory_space<vmem>>, vector<128x128xf32>
    %cst = arith.constant dense<0.000000e+00> : vector<8x128xf32>
    %5 = tpu.matmul %3, %4, %cst {dimension_numbers = #tpu.dot_dimension_numbers<[1], [1], [0], [0], [0, 0, 1, 0], [], []>} : vector<8x128xf32>, vector<128x128xf32>, vector<8x128xf32> -> vector<8x128xf32>
    %c128_i32 = arith.constant 128 : i32
    %6 = arith.muli %arg1, %c128_i32 : i32
    %7 = tpu.iota {dimensions = array<i32: 1>} : vector<1x128xi32>
    %8 = vector.broadcast %6 : i32 to vector<1x128xi32>
    %9 = arith.addi %8, %7 : vector<1x128xi32>
    %c20_i32 = arith.constant 20 : i32
    %10 = vector.broadcast %c20_i32 : i32 to vector<1x128xi32>
    %11 = arith.cmpi slt, %9, %10 : vector<1x128xi32>
    %cst_4 = arith.constant -1.000000e+30 : f32
    %12 = vector.shape_cast %11 : vector<1x128xi1> to vector<1x128xi1>
    %13 = vector.broadcast %12 : vector<1x128xi1> to vector<8x128xi1>
    %14 = vector.broadcast %cst_4 : f32 to vector<8x128xf32>
    %15 = arith.select %13, %5, %14 : vector<8x128xi1>, vector<8x128xf32>
    %c0_5 = arith.constant 0 : index
    %c0_6 = arith.constant 0 : index
    %16 = vector.load %arg5[%c0_5, %c0_6] : memref<8x1xf32, #tpu.memory_space<vmem>>, vector<8x1xf32>
    %cst_7 = arith.constant dense<0xFF800000> : vector<8xf32>
    %17 = vector.multi_reduction <maximumf>, %15, %cst_7 [1] : vector<8x128xf32> to vector<8xf32>
    %18 = vector.shape_cast %17 : vector<8xf32> to vector<8x1xf32>
    %19 = arith.maximumf %16, %18 : vector<8x1xf32>
    %20 = arith.subf %16, %19 : vector<8x1xf32>
    %21 = math.exp %20 : vector<8x1xf32>
    %c0_8 = arith.constant 0 : index
    %c0_9 = arith.constant 0 : index
    %22 = vector.load %arg6[%c0_8, %c0_9] : memref<8x1xf32, #tpu.memory_space<vmem>>, vector<8x1xf32>
    %23 = arith.mulf %21, %22 : vector<8x1xf32>
    %24 = vector.broadcast %19 : vector<8x1xf32> to vector<8x128xf32>
    %25 = arith.subf %15, %24 : vector<8x128xf32>
    %26 = math.exp %25 : vector<8x128xf32>
    %cst_10 = arith.constant dense<0.000000e+00> : vector<8xf32>
    %27 = vector.multi_reduction <add>, %26, %cst_10 [1] : vector<8x128xf32> to vector<8xf32>
    %28 = vector.shape_cast %27 : vector<8xf32> to vector<8x1xf32>
    %29 = arith.addf %23, %28 : vector<8x1xf32>
    %c0_11 = arith.constant 0 : index
    %c0_12 = arith.constant 0 : index
    %30 = vector.load %arg6[%c0_11, %c0_12] : memref<8x1xf32, #tpu.memory_space<vmem>>, vector<8x1xf32>
    tpu.vector_store %arg6[%c0_11, %c0_12], %29 {strides = array<i32>} : memref<8x1xf32, #tpu.memory_space<vmem>>, vector<8x1xf32>,
    %c0_13 = arith.constant 0 : index
    %c0_14 = arith.constant 0 : index
    %31 = vector.load %arg5[%c0_13, %c0_14] : memref<8x1xf32, #tpu.memory_space<vmem>>, vector<8x1xf32>
    tpu.vector_store %arg5[%c0_13, %c0_14], %19 {strides = array<i32>} : memref<8x1xf32, #tpu.memory_space<vmem>>, vector<8x1xf32>,
    %c0_i32_15 = arith.constant 0 : i32
    %32 = arith.cmpi eq, %arg1, %c0_i32_15 : i32
    %33 = arith.extui %32 : i1 to i32
    %c0_i32_16 = arith.constant 0 : i32
    %34 = arith.cmpi ne, %33, %c0_i32_16 : i32
    scf.if %34 {
      %c0_17 = arith.constant 0 : index
      %c0_18 = arith.constant 0 : index
      %35 = vector.load %arg5[%c0_17, %c0_18] : memref<8x1xf32, #tpu.memory_space<vmem>>, vector<8x1xf32>
      %c0_19 = arith.constant 0 : index
      %c0_20 = arith.constant 0 : index
      %36 = vector.load %arg6[%c0_19, %c0_20] : memref<8x1xf32, #tpu.memory_space<vmem>>, vector<8x1xf32>
      %37 = math.log %36 : vector<8x1xf32>
      %38 = arith.addf %35, %37 : vector<8x1xf32>
      %c0_21 = arith.constant 0 : index
      %c0_22 = arith.constant 0 : index
      %39 = vector.load %arg4[%c0_21, %c0_22] : memref<8x1xf32, #tpu.memory_space<vmem>>, vector<8x1xf32>
      tpu.vector_store %arg4[%c0_21, %c0_22], %38 {strides = array<i32>} : memref<8x1xf32, #tpu.memory_space<vmem>>, vector<8x1xf32>,
    } else {
    }
    return
  }
  func.func @transform_0(%arg0: i32, %arg1: i32) -> (i32, i32) {
    %c0_i32 = arith.constant 0 : i32
    %c0_i32_0 = arith.constant 0 : i32
    return %arg0, %c0_i32 : i32, i32
  }
  func.func @transform_1(%arg0: i32, %arg1: i32) -> (i32, i32) {
    %c0_i32 = arith.constant 0 : i32
    %c0_i32_0 = arith.constant 0 : i32
    return %arg1, %c0_i32 : i32, i32
  }
  func.func @transform_2(%arg0: i32, %arg1: i32) -> (i32, i32) {
    %c0_i32 = arith.constant 0 : i32
    %c0_i32_0 = arith.constant 0 : i32
    return %arg0, %c0_i32 : i32, i32
  }
}

</mosaic_0001>

<llo_original>
// kernel: tpu_custom_call.1
$region0: #{tpu_custom_call.1}
  #allocation0 [shape = 'u32[]', space=smem, size = 0x4, offset = 0x4, fixed_abs, tag = 'smem constant byte address 0x4 - core index']
  #allocation1 [shape = 'u32[72,128]{1,0:T(1,128)}', space=vmem, size = 0x9000, scoped, tag = 'internal scratch']
  #allocation2 [shape = 'f32[8,1]{1,0:T(8,128)}', space=vmem, size = 0x1000, scoped, tag = 'scratch operand']
  #allocation3 [shape = 'f32[8,1]{1,0:T(8,128)}', space=vmem, size = 0x1000, scoped, tag = 'scratch operand']
  %s0 = inlined_call_operand.hbm [shape: f32[8,128], index: 0, kind: input, shape index: {}]
  %s1 = inlined_call_operand.hbm [shape: f32[128,128], index: 1, kind: input, shape index: {}]
  %s2 = inlined_call_operand.vmem [shape: f32[8,1], index: 2, kind: output, shape index: {}]
  %s3 = sld [smem:[#allocation0]]
  $region34: #{tpu_custom_call.1} parent=0
    _
  %s5 = ssub.s32 1, %s3
  %s6 = scalar_select 0, %s5, %s3
  $region1: #{tpu_custom_call.1} parent=0
    #allocation4 [shape = 'u8[4096]{0}', space=vmem, size = 0x1000, scoped, tag = 'input window, operand 0, single buffered']
    #allocation5 [shape = 's32[1]{0}', space=sflag, size = 0x4, scoped, tag = 'scoped memory for tpu_custom_call.1']
    #allocation6 [shape = 'u8[65536]{0}', space=vmem, size = 0x10000, scoped, tag = 'input window, operand 1, single buffered']
    #allocation7 [shape = 's32[1]{0}', space=sflag, size = 0x4, scoped, tag = 'scoped memory for tpu_custom_call.1']
    %7 = vsyncpa [#allocation5], 0
    %8 = vsyncpa [#allocation7], 0
    // Predicated region
    $region2: #{tpu_custom_call.1} parent=1 // pred_check
      _
    $region3: #{tpu_custom_call.1} parent=1 // pred_check_branch
      %10 = sbr.rel (0) target = $region5
    $region4: #{tpu_custom_call.1} parent=1 // pred_region
      %12 = vsyncadd [#allocation5], 0
      %s14 = sshll.u32 %s0, 4
      %s15 = int_to_ptr.hbm [resolvable:$true] %s14
      %s16 = sshll.u32 [#allocation4], 4
      %s17 = int_to_ptr.vmem [resolvable:$true] %s16
      %19 = dma.hbm_to_vmem [thread:$0]  %s15, 128, %s17, [#allocation5]
    $region5: #{tpu_custom_call.1} parent=1 // pred_fallthru
      _
    // Predicated region
    $region6: #{tpu_custom_call.1} parent=1 // pred_check
      _
    $region7: #{tpu_custom_call.1} parent=1 // pred_check_branch
      %21 = sbr.rel (0) target = $region9
    $region8: #{tpu_custom_call.1} parent=1 // pred_region
      %23 = vsyncadd [#allocation7], 0
      %s24 = sshll.u32 %s1, 4
      %s25 = int_to_ptr.hbm [resolvable:$true] %s24
      %s26 = sshll.u32 [#allocation6], 4
      %s27 = int_to_ptr.vmem [resolvable:$true] %s26
      %32 = dma.hbm_to_vmem [thread:$0]  %s25, 2048, %s27, [#allocation7], 128, 128, 8
    $region9: #{tpu_custom_call.1} parent=1 // pred_fallthru
      _
    // Predicated region
    $region10: #{tpu_custom_call.1} parent=1 // pred_check
      _
    $region11: #{tpu_custom_call.1} parent=1 // pred_check_branch
      %34 = sbr.rel (0) target = $region13
    $region12: #{tpu_custom_call.1} parent=1 // pred_region
      %36 = dma.done [#allocation5], 128
    $region13: #{tpu_custom_call.1} parent=1 // pred_fallthru
      _
    // Predicated region
    $region14: #{tpu_custom_call.1} parent=1 // pred_check
      _
    $region15: #{tpu_custom_call.1} parent=1 // pred_check_branch
      %38 = sbr.rel (0) target = $region17
    $region16: #{tpu_custom_call.1} parent=1 // pred_region
      %40 = dma.done [#allocation7], 2048
    $region17: #{tpu_custom_call.1} parent=1 // pred_fallthru
      _
    %p41 = scmp.eq.s32.totalorder 0, 0
    // Predicated region
    $region18: #{tpu_custom_call.1} parent=1 // pred_check
      %p42 = pneg %p41
    $region19: #{tpu_custom_call.1} parent=1 // pred_check_branch
      %44 = sbr.rel (%p42) target = $region21
    $region20: #{tpu_custom_call.1} parent=1 // pred_region
      %vm45 = vcmask 7168
      %46 = vst.msk [vmem:[#allocation2] sm:$0xff] %vm45, -inf
      %47 = vst.msk [vmem:[#allocation3] sm:$0xff] %vm45, 0.0
    $region21: #{tpu_custom_call.1} parent=1 // pred_fallthru
      _
    %v48 = vld [vmem:[#allocation4] sm:$0xff]
    %v49 = vld [vmem:[#allocation6] sm:$0xff]
    %v50 = vld [vmem:[#allocation6 + $0x8] sm:$0xff]
    %v51 = vld [vmem:[#allocation6 + $0x10] sm:$0xff]
    %v52 = vld [vmem:[#allocation6 + $0x18] sm:$0xff]
    %v53 = vld [vmem:[#allocation6 + $0x20] sm:$0xff]
    %v54 = vld [vmem:[#allocation6 + $0x28] sm:$0xff]
    %v55 = vld [vmem:[#allocation6 + $0x30] sm:$0xff]
    %v56 = vld [vmem:[#allocation6 + $0x38] sm:$0xff]
    %v57 = vld [vmem:[#allocation6 + $0x40] sm:$0xff]
    %v58 = vld [vmem:[#allocation6 + $0x48] sm:$0xff]
    %v59 = vld [vmem:[#allocation6 + $0x50] sm:$0xff]
    %v60 = vld [vmem:[#allocation6 + $0x58] sm:$0xff]
    %v61 = vld [vmem:[#allocation6 + $0x60] sm:$0xff]
    %v62 = vld [vmem:[#allocation6 + $0x68] sm:$0xff]
    %v63 = vld [vmem:[#allocation6 + $0x70] sm:$0xff]
    %v64 = vld [vmem:[#allocation6 + $0x78] sm:$0xff]
    %65 = vmatpush.xpose.msra.mxu0 %v64
    %66 = vmatpush.xpose.msra.mxu0 %v63
    %67 = vmatpush.xpose.msra.mxu0 %v62
    %68 = vmatpush.xpose.msra.mxu0 %v61
    %69 = vmatpush.xpose.msra.mxu0 %v60
    %70 = vmatpush.xpose.msra.mxu0 %v59
    %71 = vmatpush.xpose.msra.mxu0 %v58
    %72 = vmatpush.xpose.msra.mxu0 %v57
    %73 = vmatpush.xpose.msra.mxu0 %v56
    %74 = vmatpush.xpose.msra.mxu0 %v55
    %75 = vmatpush.xpose.msra.mxu0 %v54
    %76 = vmatpush.xpose.msra.mxu0 %v53
    %77 = vmatpush.xpose.msra.mxu0 %v52
    %78 = vmatpush.xpose.msra.mxu0 %v51
    %79 = vmatpush.xpose.msra.mxu0 %v50
    %80 = vmatpush.xpose.msra.mxu0 %v49
    %81 = vmatmul.f32.gmra.mxu0 %v48
    %v82 = vpop.f32.mrf.mxu0
    %v83 = vadd.f32 0.0, %v82
    %84 = vdwg.mxu0
    %s85 = smul.u32 0, 128
    %v86 = vlaneseq
    %v87 = vand.u32 %v86, 127
    %v88 = vstv %s85
    %v89 = vadd.s32 %v88, %v87
    %vm90 = vcmp.lt.s32.totalorder %v89, 20
    %v91 = vsel %vm90, 1, 0
    %vm92 = vcmp.eq.s32.totalorder %v91, 1
    %v93 = vsel %vm92, %v83, -1e+30
    %v94 = vld [vmem:[#allocation2] sm:$0xff]
    %95 = vmax.xlane.f32.xlu0 %v93
    %v96 = vpop.xlane.xlu0 %95
    %v97 = vmax.f32 %v94, %v96
    %v98 = vsub.f32 %v94, %v97
    %v99 = vmul.f32 %v98, 1.442695
    %v100 = vpow.pop %v99
    %v101 = vld [vmem:[#allocation3] sm:$0xff]
    %v102 = vmul.f32 %v100, %v101
    %104 = vset.pattern.permute.xlu0 0
    %105 = vperm.xlu0 %104, %v97
    %v106 = vpop.permute.xlu0 %105
    %v108 = vsub.f32 %v93, %v106
    %v109 = vmul.f32 %v108, 1.442695
    %v110 = vpow.pop %v109
    %111 = vadd.xlane.f32.xlu0 %v110
    %v112 = vpop.xlane.xlu0 %111
    %v113 = vadd.f32 %v102, %v112
    %vm114 = vcmask 7168
    %115 = vst.msk [vmem:[#allocation3] sm:$0xff] %vm114, %v113
    %116 = vst.msk [vmem:[#allocation2] sm:$0xff] %vm114, %v97
    // Predicated region
    $region22: #{tpu_custom_call.1} parent=1 // pred_check
      %p117 = pneg %p41
    $region23: #{tpu_custom_call.1} parent=1 // pred_check_branch
      %119 = sbr.rel (%p117) target = $region25
    $region24: #{tpu_custom_call.1} parent=1 // pred_region
      %v120 = vld [vmem:[#allocation2] sm:$0xff]
      %v121 = vld [vmem:[#allocation3] sm:$0xff]
      %v122 = vlog2.pop %v121
      %v123 = vmul.f32 %v122, 0.6931472
      %v124 = vadd.f32 %v120, %v123
      %125 = vst.msk [vmem:[%s2] sm:$0xff] %vm114, %v124
    $region25: #{tpu_custom_call.1} parent=1 // pred_fallthru
      _
    // Predicated region
    $region26: #{tpu_custom_call.1} parent=1 // pred_check
      _
    $region27: #{tpu_custom_call.1} parent=1 // pred_check_branch
      %127 = sbr.rel (0) target = $region29
    $region28: #{tpu_custom_call.1} parent=1 // pred_region
      _
    $region29: #{tpu_custom_call.1} parent=1 // pred_fallthru
      _
    // Predicated region
    $region30: #{tpu_custom_call.1} parent=1 // pred_check
      _
    $region31: #{tpu_custom_call.1} parent=1 // pred_check_branch
      %129 = sbr.rel (0) target = $region33
    $region32: #{tpu_custom_call.1} parent=1 // pred_region
      _
    $region33: #{tpu_custom_call.1} parent=1 // pred_fallthru
      _
    %130 = vsyncpa [#allocation5], 1
    %131 = vsyncpa [#allocation7], 1

</llo_original>
